<compile_context>
chip_gen: v7x
topology: tpu7x:2x2x1
jax: 0.10.0
libtpu: 0.0.40
codegen_flags: <defaults>
</compile_context>

<pallas_src>
import functools
import itertools

import jax
import jax.numpy as jnp
from jax.experimental import pallas as pl
from jax.experimental.pallas import tpu as pltpu


def afm_kernel(x_ref, w_ref, b_ref, h_ref, pp_ref, out_ref, *, pairs):
    # x_ref   : (F, TILE_B, E)  stacked field embeddings for this batch tile
    # w_ref   : (E, A)          attention_W
    # b_ref   : (1, A)          attention_b
    # h_ref   : (A, 1)          projection_h
    # pp_ref  : (E, 1)          projection_p
    # out_ref : (TILE_B, 1)     afm_out for this batch tile
    w = w_ref[...].astype(jnp.float32)
    b = b_ref[...].astype(jnp.float32)
    h = h_ref[...].astype(jnp.float32)
    pp = pp_ref[...].astype(jnp.float32)

    num_fields = x_ref.shape[0]
    fields = [x_ref[f].astype(jnp.float32) for f in range(num_fields)]  # each (TB, E)

    # bi_interaction = p * q, built in VMEM, pair-major: (P, TB, E)
    bi = jnp.stack([fields[i] * fields[j] for (i, j) in pairs], axis=0)

    # attention_temp = relu(bi @ W + b)  -- single dot_general, large free dim (P*TB)
    att = jnp.einsum('pbe,ea->pba', bi, w, preferred_element_type=jnp.float32)
    att = jnp.maximum(att + b[None], 0.0)                                # (P, TB, A)

    # attention scores and fused projection-p scalar per pair
    score = jnp.einsum('pba,ao->pbo', att, h,
                       preferred_element_type=jnp.float32)               # (P, TB, 1)
    s = jnp.einsum('pbe,eo->pbo', bi, pp,
                   preferred_element_type=jnp.float32)                   # (P, TB, 1)

    # softmax over the pair axis (dim=1 of the original (B, P, 1) tensor)
    m = jnp.max(score, axis=0, keepdims=True)
    e = jnp.exp(score - m)
    denom = jnp.sum(e, axis=0, keepdims=True)
    norm = e / denom                                                     # (P, TB, 1)

    # afm_out[b] = sum_p norm[p,b] * (bi[p,b,:] @ projection_p)
    #            == (sum_p norm[p,b] * bi[p,b,:]) @ projection_p   (linearity)
    out_ref[...] = jnp.sum(norm * s, axis=0).astype(out_ref.dtype)       # (TB, 1)


def afm_layer(embeds_vec_list, attention_W, attention_b, projection_h, projection_p,
              *, tile_b=8):
    """embeds_vec_list: list of (B, 1, E) arrays (one per field)."""
    num_fields = len(embeds_vec_list)
    pairs = tuple(itertools.combinations(range(num_fields), 2))

    # One (F, B, E) array in HBM -- no duplicated p/q bytes.
    x = jnp.stack([jnp.squeeze(ev, axis=1) for ev in embeds_vec_list], axis=0)
    _, B, E = x.shape
    A = attention_W.shape[1]

    # Pad batch to a multiple of tile_b (padding rows are zeros -> harmless, sliced off).
    n_tiles = pl.cdiv(B, tile_b)
    B_pad = n_tiles * tile_b
    if B_pad != B:
        x = jnp.pad(x, ((0, 0), (0, B_pad - B), (0, 0)))

    b2 = attention_b.reshape(1, -1)  # (1, A)

    grid_spec = pltpu.PrefetchScalarGridSpec(
        num_scalar_prefetch=0,
        grid=(n_tiles,),
        in_specs=[
            # batch-tiled field embeddings
            pl.BlockSpec((num_fields, tile_b, E), lambda i: (0, i, 0)),
            # parameters: constant index_map -> fetched once, VMEM-resident
            pl.BlockSpec((E, A), lambda i: (0, 0)),
            pl.BlockSpec((1, A), lambda i: (0, 0)),
            pl.BlockSpec((A, 1), lambda i: (0, 0)),
            pl.BlockSpec((E, 1), lambda i: (0, 0)),
        ],
        out_specs=pl.BlockSpec((tile_b, 1), lambda i: (i, 0)),
    )

    out = pl.pallas_call(
        functools.partial(afm_kernel, pairs=pairs),
        out_shape=jax.ShapeDtypeStruct((B_pad, 1), jnp.float32),
        grid_spec=grid_spec,
        compiler_params=pltpu.CompilerParams(
            dimension_semantics=("parallel",),
        ),
    )(x, attention_W, b2, projection_h, projection_p)
    return out[:B]


def afm_reference(embeds_vec_list, attention_W, attention_b, projection_h, projection_p):
    row, col = [], []
    for r, c in itertools.combinations(embeds_vec_list, 2):
        row.append(r)
        col.append(c)
    p = jnp.concatenate(row, axis=1)
    q = jnp.concatenate(col, axis=1)
    bi = p * q
    att = jax.nn.relu(jnp.tensordot(bi, attention_W, axes=([-1], [0])) + attention_b)
    score = jax.nn.softmax(jnp.tensordot(att, projection_h, axes=([-1], [0])), axis=1)
    attn_out = jnp.sum(score * bi, axis=1)
    return jnp.tensordot(attn_out, projection_p, axes=([-1], [0]))


if __name__ == "__main__":
    B = 16           # batch (2 grid steps with tile_b=8)
    num_fields = 5   # P = C(5,2) = 10 pairs
    E = 32           # in_features / embedding_size
    A = 4            # attention_factor

    key = jax.random.PRNGKey(0)
    k_embeds, k_w, k_h, k_p = jax.random.split(key, 4)

    embeds = jax.random.normal(k_embeds, (num_fields, B, 1, E), dtype=jnp.float32)
    embeds_vec_list = [embeds[i] for i in range(num_fields)]

    # Deterministic xavier_normal_-style initialization
    attention_W = jax.random.normal(k_w, (E, A), jnp.float32) * jnp.sqrt(2.0 / (E + A))
    attention_b = jnp.zeros((A,), jnp.float32)
    projection_h = jax.random.normal(k_h, (A, 1), jnp.float32) * jnp.sqrt(2.0 / (A + 1))
    projection_p = jax.random.normal(k_p, (E, 1), jnp.float32) * jnp.sqrt(2.0 / (E + 1))

    out = afm_layer(embeds_vec_list, attention_W, attention_b, projection_h, projection_p)
    out = jax.block_until_ready(out)
    ref = afm_reference(embeds_vec_list, attention_W, attention_b, projection_h, projection_p)
    assert out.shape == (B, 1)
    assert jnp.allclose(out, ref, atol=1e-5, rtol=1e-5), (out, ref)

    # Also exercise the batch-padding path (B not a multiple of tile_b).
    B2 = 11
    embeds_vec_list2 = [e[:B2] for e in embeds_vec_list]
    out2 = jax.block_until_ready(
        afm_layer(embeds_vec_list2, attention_W, attention_b, projection_h, projection_p))
    ref2 = afm_reference(embeds_vec_list2, attention_W, attention_b, projection_h, projection_p)
    assert out2.shape == (B2, 1)
    assert jnp.allclose(out2, ref2, atol=1e-5, rtol=1e-5), (out2, ref2)

    print("KERNEL_OK")
</pallas_src>

<mosaic_0001>
module attributes {stable_mosaic.version = 11 : i64} {
  func.func @afm_kernel(%arg0: i32, %arg1: memref<5x8x32xf32, #tpu.memory_space<vmem>>, %arg2: memref<32x4xf32, #tpu.memory_space<vmem>>, %arg3: memref<1x4xf32, #tpu.memory_space<vmem>>, %arg4: memref<4x1xf32, #tpu.memory_space<vmem>>, %arg5: memref<32x1xf32, #tpu.memory_space<vmem>>, %arg6: memref<8x1xf32, #tpu.memory_space<vmem>>) attributes {dimension_semantics = [#tpu.dimension_semantics<parallel>], iteration_bounds = array<i64: 2>, scalar_prefetch = 0 : i64, scratch_operands = 0 : i64, tpu.core_type = #tpu.core_type<tc>, window_params = [{transform_indices = @transform_0, window_bounds = array<i64: 5, 8, 32>}, {pipeline_mode = #tpu.pipeline_mode<synchronous>, transform_indices = @transform_1, window_bounds = array<i64: 32, 4>}, {pipeline_mode = #tpu.pipeline_mode<synchronous>, transform_indices = @transform_2, window_bounds = array<i64: 1, 4>}, {pipeline_mode = #tpu.pipeline_mode<synchronous>, transform_indices = @transform_3, window_bounds = array<i64: 4, 1>}, {pipeline_mode = #tpu.pipeline_mode<synchronous>, transform_indices = @transform_4, window_bounds = array<i64: 32, 1>}, {transform_indices = @transform_5, window_bounds = array<i64: 8, 1>}]} {
    %c0 = arith.constant 0 : index
    %c0_0 = arith.constant 0 : index
    %0 = vector.load %arg2[%c0, %c0_0] : memref<32x4xf32, #tpu.memory_space<vmem>>, vector<32x4xf32>
    %c0_1 = arith.constant 0 : index
    %c0_2 = arith.constant 0 : index
    %1 = vector.load %arg3[%c0_1, %c0_2] : memref<1x4xf32, #tpu.memory_space<vmem>>, vector<1x4xf32>
    %c0_3 = arith.constant 0 : index
    %c0_4 = arith.constant 0 : index
    %2 = vector.load %arg4[%c0_3, %c0_4] : memref<4x1xf32, #tpu.memory_space<vmem>>, vector<4x1xf32>
    %c0_5 = arith.constant 0 : index
    %c0_6 = arith.constant 0 : index
    %3 = vector.load %arg5[%c0_5, %c0_6] : memref<32x1xf32, #tpu.memory_space<vmem>>, vector<32x1xf32>
    %c0_7 = arith.constant 0 : index
    %c0_8 = arith.constant 0 : index
    %c0_9 = arith.constant 0 : index
    %4 = vector.load %arg1[%c0_7, %c0_8, %c0_9] : memref<5x8x32xf32, #tpu.memory_space<vmem>>, vector<1x8x32xf32>
    %5 = vector.shape_cast %4 : vector<1x8x32xf32> to vector<8x32xf32>
    %c1 = arith.constant 1 : index
    %c0_10 = arith.constant 0 : index
    %c0_11 = arith.constant 0 : index
    %6 = vector.load %arg1[%c1, %c0_10, %c0_11] : memref<5x8x32xf32, #tpu.memory_space<vmem>>, vector<1x8x32xf32>
    %7 = vector.shape_cast %6 : vector<1x8x32xf32> to vector<8x32xf32>
    %c2 = arith.constant 2 : index
    %c0_12 = arith.constant 0 : index
    %c0_13 = arith.constant 0 : index
    %8 = vector.load %arg1[%c2, %c0_12, %c0_13] : memref<5x8x32xf32, #tpu.memory_space<vmem>>, vector<1x8x32xf32>
    %9 = vector.shape_cast %8 : vector<1x8x32xf32> to vector<8x32xf32>
    %c3 = arith.constant 3 : index
    %c0_14 = arith.constant 0 : index
    %c0_15 = arith.constant 0 : index
    %10 = vector.load %arg1[%c3, %c0_14, %c0_15] : memref<5x8x32xf32, #tpu.memory_space<vmem>>, vector<1x8x32xf32>
    %11 = vector.shape_cast %10 : vector<1x8x32xf32> to vector<8x32xf32>
    %c4 = arith.constant 4 : index
    %c0_16 = arith.constant 0 : index
    %c0_17 = arith.constant 0 : index
    %12 = vector.load %arg1[%c4, %c0_16, %c0_17] : memref<5x8x32xf32, #tpu.memory_space<vmem>>, vector<1x8x32xf32>
    %13 = vector.shape_cast %12 : vector<1x8x32xf32> to vector<8x32xf32>
    %14 = arith.mulf %5, %7 : vector<8x32xf32>
    %15 = arith.mulf %5, %9 : vector<8x32xf32>
    %16 = arith.mulf %5, %11 : vector<8x32xf32>
    %17 = arith.mulf %5, %13 : vector<8x32xf32>
    %18 = arith.mulf %7, %9 : vector<8x32xf32>
    %19 = arith.mulf %7, %11 : vector<8x32xf32>
    %20 = arith.mulf %7, %13 : vector<8x32xf32>
    %21 = arith.mulf %9, %11 : vector<8x32xf32>
    %22 = arith.mulf %9, %13 : vector<8x32xf32>
    %23 = arith.mulf %11, %13 : vector<8x32xf32>
    %24 = vector.shape_cast %14 : vector<8x32xf32> to vector<1x8x32xf32>
    %25 = vector.shape_cast %15 : vector<8x32xf32> to vector<1x8x32xf32>
    %26 = vector.shape_cast %16 : vector<8x32xf32> to vector<1x8x32xf32>
    %27 = vector.shape_cast %17 : vector<8x32xf32> to vector<1x8x32xf32>
    %28 = vector.shape_cast %18 : vector<8x32xf32> to vector<1x8x32xf32>
    %29 = vector.shape_cast %19 : vector<8x32xf32> to vector<1x8x32xf32>
    %30 = vector.shape_cast %20 : vector<8x32xf32> to vector<1x8x32xf32>
    %31 = vector.shape_cast %21 : vector<8x32xf32> to vector<1x8x32xf32>
    %32 = vector.shape_cast %22 : vector<8x32xf32> to vector<1x8x32xf32>
    %33 = vector.shape_cast %23 : vector<8x32xf32> to vector<1x8x32xf32>
    %34 = tpu.concatenate %24, %25, %26, %27, %28, %29, %30, %31, %32, %33 in 0 : vector<1x8x32xf32>, vector<1x8x32xf32>, vector<1x8x32xf32>, vector<1x8x32xf32>, vector<1x8x32xf32>, vector<1x8x32xf32>, vector<1x8x32xf32>, vector<1x8x32xf32>, vector<1x8x32xf32>, vector<1x8x32xf32> -> vector<10x8x32xf32>
    "tpu.trace_start"() <{level = 10 : i32, message = "pbe,ea->pba"}> : () -> ()
    %cst = arith.constant dense<0.000000e+00> : vector<10x8x4xf32>
    %35 = tpu.matmul %34, %0, %cst {dimension_numbers = #tpu.dot_dimension_numbers<[2], [0], [0, 1], [1], [0, 0, 0, 1, 1, 1], [], []>} : vector<10x8x32xf32>, vector<32x4xf32>, vector<10x8x4xf32> -> vector<10x8x4xf32>
    "tpu.trace_stop"() : () -> ()
    %36 = vector.shape_cast %1 : vector<1x4xf32> to vector<1x1x4xf32>
    %37 = vector.broadcast %36 : vector<1x1x4xf32> to vector<10x8x4xf32>
    %38 = arith.addf %35, %37 : vector<10x8x4xf32>
    %cst_18 = arith.constant 0.000000e+00 : f32
    %39 = vector.broadcast %cst_18 : f32 to vector<10x8x4xf32>
    %40 = arith.maximumf %38, %39 : vector<10x8x4xf32>
    "tpu.trace_start"() <{level = 10 : i32, message = "pba,ao->pbo"}> : () -> ()
    %cst_19 = arith.constant dense<0.000000e+00> : vector<10x8x1xf32>
    %41 = tpu.matmul %40, %2, %cst_19 {dimension_numbers = #tpu.dot_dimension_numbers<[2], [0], [0, 1], [1], [0, 0, 0, 1, 1, 1], [], []>} : vector<10x8x4xf32>, vector<4x1xf32>, vector<10x8x1xf32> -> vector<10x8x1xf32>
    "tpu.trace_stop"() : () -> ()
    "tpu.trace_start"() <{level = 10 : i32, message = "pbe,eo->pbo"}> : () -> ()
    %cst_20 = arith.constant dense<0.000000e+00> : vector<10x8x1xf32>
    %42 = tpu.matmul %34, %3, %cst_20 {dimension_numbers = #tpu.dot_dimension_numbers<[2], [0], [0, 1], [1], [0, 0, 0, 1, 1, 1], [], []>} : vector<10x8x32xf32>, vector<32x1xf32>, vector<10x8x1xf32> -> vector<10x8x1xf32>
    "tpu.trace_stop"() : () -> ()
    %cst_21 = arith.constant dense<0xFF800000> : vector<8x1xf32>
    %43 = vector.multi_reduction <maximumf>, %41, %cst_21 [0] : vector<10x8x1xf32> to vector<8x1xf32>
    %44 = vector.shape_cast %43 : vector<8x1xf32> to vector<1x8x1xf32>
    %45 = vector.broadcast %44 : vector<1x8x1xf32> to vector<10x8x1xf32>
    %46 = arith.subf %41, %45 : vector<10x8x1xf32>
    %47 = math.exp %46 : vector<10x8x1xf32>
    %cst_22 = arith.constant dense<0.000000e+00> : vector<8x1xf32>
    %48 = vector.multi_reduction <add>, %47, %cst_22 [0] : vector<10x8x1xf32> to vector<8x1xf32>
    %49 = vector.shape_cast %48 : vector<8x1xf32> to vector<1x8x1xf32>
    %50 = vector.broadcast %49 : vector<1x8x1xf32> to vector<10x8x1xf32>
    %51 = arith.divf %47, %50 : vector<10x8x1xf32>
    %52 = arith.mulf %51, %42 : vector<10x8x1xf32>
    %cst_23 = arith.constant dense<0.000000e+00> : vector<8x1xf32>
    %53 = vector.multi_reduction <add>, %52, %cst_23 [0] : vector<10x8x1xf32> to vector<8x1xf32>
    %c0_24 = arith.constant 0 : index
    %c0_25 = arith.constant 0 : index
    %54 = vector.load %arg6[%c0_24, %c0_25] : memref<8x1xf32, #tpu.memory_space<vmem>>, vector<8x1xf32>
    tpu.vector_store %arg6[%c0_24, %c0_25], %53 {strides = array<i32>} : memref<8x1xf32, #tpu.memory_space<vmem>>, vector<8x1xf32>,
    return
  }
  func.func @transform_0(%arg0: i32) -> (i32, i32, i32) {
    %c0_i32 = arith.constant 0 : i32
    %c0_i32_0 = arith.constant 0 : i32
    %c0_i32_1 = arith.constant 0 : i32
    return %c0_i32, %arg0, %c0_i32_0 : i32, i32, i32
  }
  func.func @transform_1(%arg0: i32) -> (i32, i32) {
    %c0_i32 = arith.constant 0 : i32
    %c0_i32_0 = arith.constant 0 : i32
    %c0_i32_1 = arith.constant 0 : i32
    return %c0_i32, %c0_i32_0 : i32, i32
  }
  func.func @transform_2(%arg0: i32) -> (i32, i32) {
    %c0_i32 = arith.constant 0 : i32
    %c0_i32_0 = arith.constant 0 : i32
    %c0_i32_1 = arith.constant 0 : i32
    return %c0_i32, %c0_i32_0 : i32, i32
  }
  func.func @transform_3(%arg0: i32) -> (i32, i32) {
    %c0_i32 = arith.constant 0 : i32
    %c0_i32_0 = arith.constant 0 : i32
    %c0_i32_1 = arith.constant 0 : i32
    return %c0_i32, %c0_i32_0 : i32, i32
  }
  func.func @transform_4(%arg0: i32) -> (i32, i32) {
    %c0_i32 = arith.constant 0 : i32
    %c0_i32_0 = arith.constant 0 : i32
    %c0_i32_1 = arith.constant 0 : i32
    return %c0_i32, %c0_i32_0 : i32, i32
  }
  func.func @transform_5(%arg0: i32) -> (i32, i32) {
    %c0_i32 = arith.constant 0 : i32
    %c0_i32_0 = arith.constant 0 : i32
    return %arg0, %c0_i32 : i32, i32
  }
}

</mosaic_0001>

<llo_original>
// kernel: tpu_custom_call.1
$region0: #{tpu_custom_call.1}
  #allocation0 [shape = 'u32[]', space=smem, size = 0x4, offset = 0x4, fixed_abs, tag = 'smem constant byte address 0x4 - core index']
  #allocation1 [shape = 'u32[144,128]{1,0:T(1,128)}', space=vmem, size = 0x12000, scoped, tag = 'internal scratch']
  %s0 = inlined_call_operand.hbm [shape: f32[5,16,32], index: 0, kind: input, shape index: {}]
  %s1 = inlined_call_operand.vmem [shape: f32[32,4], index: 1, kind: input, shape index: {}]
  %s2 = inlined_call_operand.vmem [shape: f32[1,4], index: 2, kind: input, shape index: {}]
  %s3 = inlined_call_operand.vmem [shape: f32[4,1], index: 3, kind: input, shape index: {}]
  %s4 = inlined_call_operand.vmem [shape: f32[32,1], index: 4, kind: input, shape index: {}]
  %s5 = inlined_call_operand.vmem [shape: f32[16,1], index: 5, kind: output, shape index: {}]
  %s6 = sld [smem:[#allocation0]]
  $region57: #{tpu_custom_call.1} parent=0
    _
  %s8 = ssub.s32 1, %s6
  %s9 = scalar_select 0, %s8, %s6
  $region1: #{tpu_custom_call.1} parent=0
    #allocation2 [shape = 'u8[40960]{0}', space=vmem, size = 0xa000, scoped, tag = 'input window, operand 0']
    #allocation3 [shape = 's32[2]{0}', space=sflag, size = 0x8, scoped, tag = 'scoped memory for tpu_custom_call.1']
    %10 = vsyncpa [#allocation3], 0
    %s11 = scalar_lea.sflag [#allocation3], 1
    %12 = vsyncpa %s11, 0
    loop: start=0, step=1, limit=4
    $region2: #{tpu_custom_call.1} parent=1 // loop_pre_header
      _
    $region3: #{tpu_custom_call.1} parent=1 // loop_header
      %s14 = sphi 0, %s18
      %p15 = scmp.ge.s32.totalorder %s14, 4
      %s24 = sphi 0, %s26
      %s27 = sphi 0, %s24
      %s28 = sphi 0, %s27
      %s44 = sphi 0, %s28
      %s48 = sphi 0, %s48
      %s50 = sphi 0, %s48
      %s51 = sphi 0, %s50
      %s65 = sphi 0, %s51
      %s69 = sphi 0, %s69
      %s71 = sphi 0, %s69
      %s72 = sphi 0, %s71
      %s86 = sphi 0, %s72
      %s90 = sphi 0, %s90
      %s92 = sphi 0, %s90
      %s93 = sphi 0, %s92
      %s107 = sphi 0, %s93
      %s111 = sphi 0, %s111
      %s113 = sphi 0, %s111
      %s114 = sphi 0, %s113
      %s128 = sphi 0, %s114
      %s134 = sphi 0, %s136
      %s137 = sphi 0, %s134
      %s138 = sphi 0, %s137
      %s154 = sphi 0, %s138
    $region4: #{tpu_custom_call.1} parent=1 // loop_header_branch
      %17 = sbr.rel (%p15) target = $region8
    $region5: #{tpu_custom_call.1} parent=1 // loop_body
      %s19 = ssub.s32 %s14, 1
      %s20 = ssub.s32 %s14, 2
      %s21 = sadd.s32 %s14, 1
      %s22 = ssub.s32 %s14, %s21
      %p23 = scmp.eq.s32.totalorder %s22, 0
      %s25 = sadd.s32 %s24, 1
      %s26 = scalar_select %p23, %s24, %s25
      %p29 = pneg %p23
      %p30 = scmp.eq.s32.totalorder %s14, 1
      %p31 = por %p29, %p30
      %p32 = scmp.ne.s32.totalorder %s24, %s27
      %p33 = scmp.eq.s32.totalorder %s14, 0
      %p34 = por %p32, %p33
      %p35 = scmp.ne.s32.totalorder %s24, %s27
      %p36 = scmp.eq.s32.totalorder %s19, 1
      %p37 = por %p35, %p36
      %p38 = scmp.ne.s32.totalorder %s27, %s28
      %p39 = scmp.eq.s32.totalorder %s19, 0
      %p40 = por %p38, %p39
      %p41 = scmp.ne.s32.totalorder %s27, %s28
      %p42 = scmp.eq.s32.totalorder %s20, 1
      %p43 = por %p41, %p42
      %p45 = scmp.ne.s32.totalorder %s28, %s44
      %p46 = scmp.eq.s32.totalorder %s20, 0
      %p47 = por %p45, %p46
      %s49 = sadd.s32 %s48, 1
      %p52 = scmp.eq.s32.totalorder %s14, 1
      %p53 = scmp.ne.s32.totalorder %s48, %s50
      %p54 = scmp.eq.s32.totalorder %s14, 0
      %p55 = por %p53, %p54
      %p56 = scmp.ne.s32.totalorder %s48, %s50
      %p57 = scmp.eq.s32.totalorder %s19, 1
      %p58 = por %p56, %p57
      %p59 = scmp.ne.s32.totalorder %s50, %s51
      %p60 = scmp.eq.s32.totalorder %s19, 0
      %p61 = por %p59, %p60
      %p62 = scmp.ne.s32.totalorder %s50, %s51
      %p63 = scmp.eq.s32.totalorder %s20, 1
      %p64 = por %p62, %p63
      %p66 = scmp.ne.s32.totalorder %s51, %s65
      %p67 = scmp.eq.s32.totalorder %s20, 0
      %p68 = por %p66, %p67
      %s70 = sadd.s32 %s69, 1
      %p73 = scmp.eq.s32.totalorder %s14, 1
      %p74 = scmp.ne.s32.totalorder %s69, %s71
      %p75 = scmp.eq.s32.totalorder %s14, 0
      %p76 = por %p74, %p75
      %p77 = scmp.ne.s32.totalorder %s69, %s71
      %p78 = scmp.eq.s32.totalorder %s19, 1
      %p79 = por %p77, %p78
      %p80 = scmp.ne.s32.totalorder %s71, %s72
      %p81 = scmp.eq.s32.totalorder %s19, 0
      %p82 = por %p80, %p81
      %p83 = scmp.ne.s32.totalorder %s71, %s72
      %p84 = scmp.eq.s32.totalorder %s20, 1
      %p85 = por %p83, %p84
      %p87 = scmp.ne.s32.totalorder %s72, %s86
      %p88 = scmp.eq.s32.totalorder %s20, 0
      %p89 = por %p87, %p88
      %s91 = sadd.s32 %s90, 1
      %p94 = scmp.eq.s32.totalorder %s14, 1
      %p95 = scmp.ne.s32.totalorder %s90, %s92
      %p96 = scmp.eq.s32.totalorder %s14, 0
      %p97 = por %p95, %p96
      %p98 = scmp.ne.s32.totalorder %s90, %s92
      %p99 = scmp.eq.s32.totalorder %s19, 1
      %p100 = por %p98, %p99
      %p101 = scmp.ne.s32.totalorder %s92, %s93
      %p102 = scmp.eq.s32.totalorder %s19, 0
      %p103 = por %p101, %p102
      %p104 = scmp.ne.s32.totalorder %s92, %s93
      %p105 = scmp.eq.s32.totalorder %s20, 1
      %p106 = por %p104, %p105
      %p108 = scmp.ne.s32.totalorder %s93, %s107
      %p109 = scmp.eq.s32.totalorder %s20, 0
      %p110 = por %p108, %p109
      %s112 = sadd.s32 %s111, 1
      %p115 = scmp.eq.s32.totalorder %s14, 1
      %p116 = scmp.ne.s32.totalorder %s111, %s113
      %p117 = scmp.eq.s32.totalorder %s14, 0
      %p118 = por %p116, %p117
      %p119 = scmp.ne.s32.totalorder %s111, %s113
      %p120 = scmp.eq.s32.totalorder %s19, 1
      %p121 = por %p119, %p120
      %p122 = scmp.ne.s32.totalorder %s113, %s114
      %p123 = scmp.eq.s32.totalorder %s19, 0
      %p124 = por %p122, %p123
      %p125 = scmp.ne.s32.totalorder %s113, %s114
      %p126 = scmp.eq.s32.totalorder %s20, 1
      %p127 = por %p125, %p126
      %p129 = scmp.ne.s32.totalorder %s114, %s128
      %p130 = scmp.eq.s32.totalorder %s20, 0
      %p131 = por %p129, %p130
      %s132 = ssub.s32 %s14, %s21
      %p133 = scmp.eq.s32.totalorder %s132, 0
      %s135 = sadd.s32 %s134, 1
      %s136 = scalar_select %p133, %s134, %s135
      %p139 = pneg %p133
      %p140 = scmp.eq.s32.totalorder %s14, 1
      %p141 = por %p139, %p140
      %p142 = scmp.ne.s32.totalorder %s134, %s137
      %p143 = scmp.eq.s32.totalorder %s14, 0
      %p144 = por %p142, %p143
      %p145 = scmp.ne.s32.totalorder %s134, %s137
      %p146 = scmp.eq.s32.totalorder %s19, 1
      %p147 = por %p145, %p146
      %p148 = scmp.ne.s32.totalorder %s137, %s138
      %p149 = scmp.eq.s32.totalorder %s19, 0
      %p150 = por %p148, %p149
      %p151 = scmp.ne.s32.totalorder %s137, %s138
      %p152 = scmp.eq.s32.totalorder %s20, 1
      %p153 = por %p151, %p152
      %p155 = scmp.ne.s32.totalorder %s138, %s154
      %p156 = scmp.eq.s32.totalorder %s20, 0
      %p157 = por %p155, %p156
      %p158 = scmp.le.s32.totalorder 1, %s14
      %p159 = scmp.lt.s32.totalorder %s14, 3
      %p160 = pnand %p158, %p159
      %p161 = pneg %p160
      // Predicated region
      $region9: #{tpu_custom_call.1} parent=5 // pred_check
        _
      $region10: #{tpu_custom_call.1} parent=5 // pred_check_branch
        %163 = sbr.rel (%p160) target = $region12
      $region11: #{tpu_custom_call.1} parent=5 // pred_region
        %s164 = ssub.s32 %s14, 1
        // Predicated region
        $region13: #{tpu_custom_call.1} parent=11 // pred_check
          %p165 = pneg %p61
        $region14: #{tpu_custom_call.1} parent=11 // pred_check_branch
          %167 = sbr.rel (%p165) target = $region16
        $region15: #{tpu_custom_call.1} parent=11 // pred_region
          _
        $region16: #{tpu_custom_call.1} parent=11 // pred_fallthru
          _
        // Predicated region
        $region17: #{tpu_custom_call.1} parent=11 // pred_check
          %p168 = pneg %p82
        $region18: #{tpu_custom_call.1} parent=11 // pred_check_branch
          %170 = sbr.rel (%p168) target = $region20
        $region19: #{tpu_custom_call.1} parent=11 // pred_region
          _
        $region20: #{tpu_custom_call.1} parent=11 // pred_fallthru
          _
        // Predicated region
        $region21: #{tpu_custom_call.1} parent=11 // pred_check
          %p171 = pneg %p103
        $region22: #{tpu_custom_call.1} parent=11 // pred_check_branch
          %173 = sbr.rel (%p171) target = $region24
        $region23: #{tpu_custom_call.1} parent=11 // pred_region
          _
        $region24: #{tpu_custom_call.1} parent=11 // pred_fallthru
          _
        // Predicated region
        $region25: #{tpu_custom_call.1} parent=11 // pred_check
          %p174 = pneg %p124
        $region26: #{tpu_custom_call.1} parent=11 // pred_check_branch
          %176 = sbr.rel (%p174) target = $region28
        $region27: #{tpu_custom_call.1} parent=11 // pred_region
          _
        $region28: #{tpu_custom_call.1} parent=11 // pred_fallthru
          _
      $region12: #{tpu_custom_call.1} parent=5 // pred_fallthru
        _
      %p177 = scmp.lt.s32.totalorder %s14, 2
      // Predicated region
      $region29: #{tpu_custom_call.1} parent=5 // pred_check
        %p178 = pneg %p177
      $region30: #{tpu_custom_call.1} parent=5 // pred_check_branch
        %180 = sbr.rel (%p178) target = $region32
      $region31: #{tpu_custom_call.1} parent=5 // pred_region
        // Predicated region
        $region33: #{tpu_custom_call.1} parent=31 // pred_check
          %p181 = pneg %p34
        $region34: #{tpu_custom_call.1} parent=31 // pred_check_branch
          %183 = sbr.rel (%p181) target = $region36
        $region35: #{tpu_custom_call.1} parent=31 // pred_region
          %s184 = sand.u32 %s24, 1
          %s185 = scalar_lea.sflag [#allocation3], %s184
          %s186 = sand.u32 %s24, 1
          %s187 = smul.addr %s186, 40
          %s188 = scalar_lea.vmem [#allocation2], %s187
          %s190 = ssub.s32 640, 640
          %191 = vsyncadd %s185, %s190
          %s192 = smul.addr %s14, 128
          %s193 = scalar_lea.hbm %s0, %s192
          %s194 = sshll.u32 %s188, 4
          %s195 = int_to_ptr.vmem [resolvable:$true] %s194
          %200 = dma.hbm_to_vmem [thread:$0]  %s193, 640, %s195, %s185, 256, 128, 8
        $region36: #{tpu_custom_call.1} parent=31 // pred_fallthru
          _
      $region32: #{tpu_custom_call.1} parent=5 // pred_fallthru
        _
      %p201 = scmp.le.s32.totalorder 1, %s14
      %p202 = scmp.lt.s32.totalorder %s14, 3
      %p203 = pnand %p201, %p202
      %p204 = pneg %p203
      // Predicated region
      $region37: #{tpu_custom_call.1} parent=5 // pred_check
        _
      $region38: #{tpu_custom_call.1} parent=5 // pred_check_branch
        %206 = sbr.rel (%p203) target = $region40
      $region39: #{tpu_custom_call.1} parent=5 // pred_region
        %s207 = ssub.s32 %s14, 1
        %s208 = sand.u32 %s27, 1
        %s209 = scalar_lea.sflag [#allocation3], %s208
        %s210 = sand.u32 %s27, 1
        %s211 = smul.addr %s210, 40
        %s212 = scalar_lea.vmem [#allocation2], %s211
        // Predicated region
        $region41: #{tpu_custom_call.1} parent=39 // pred_check
          %p213 = pneg %p40
        $region42: #{tpu_custom_call.1} parent=39 // pred_check_branch
          %215 = sbr.rel (%p213) target = $region44
        $region43: #{tpu_custom_call.1} parent=39 // pred_region
          %216 = dma.done %s209, 640
        $region44: #{tpu_custom_call.1} parent=39 // pred_fallthru
          _
        %s217 = sand.u32 %s27, 1
        %s218 = scalar_lea.sflag [#allocation3], %s217
        %s219 = sand.u32 %s27, 1
        %s220 = smul.addr %s219, 40
        %s221 = scalar_lea.vmem [#allocation2], %s220
        %p222 = pneg %p40
        %p223 = pneg %p37
        %p224 = pneg %p61
        %p225 = pneg %p58
        %p226 = pneg %p82
        %p227 = pneg %p79
        %p228 = pneg %p103
        %p229 = pneg %p100
        %p230 = pneg %p124
        %p231 = pneg %p121
        %p232 = pneg %p150
        %p233 = pneg %p147
        %p234 = scmp.lt.s32.totalorder %s19, 1
        %s235 = scalar_select %p234, %s19, 1
        %s236 = smul.addr %s235, 8
        %s237 = scalar_lea.vmem %s5, %s236
        %p238 = scmp.lt.s32.totalorder %s19, 1
        %s239 = scalar_select %p238, %s19, 1
        %s240 = smul.addr %s239, 8
        %s241 = scalar_lea.vmem %s5, %s240
        %v242 = vld [vmem:[%s1] sm:$0xff]
        %v243 = vld [vmem:[%s1 + $0x8] sm:$0xff]
        %v244 = vld [vmem:[%s1 + $0x10] sm:$0xff]
        %v245 = vld [vmem:[%s1 + $0x18] sm:$0xff]
        %v246 = vld [vmem:[%s2] sm:$0x1]
        %v247 = vld [vmem:[%s3] sm:$0xf]
        %v248 = vld [vmem:[%s4] sm:$0xff]
        %v249 = vld [vmem:[%s4 + $0x8] sm:$0xff]
        %v250 = vld [vmem:[%s4 + $0x10] sm:$0xff]
        %v251 = vld [vmem:[%s4 + $0x18] sm:$0xff]
        %v252 = vld [vmem:[%s212] sm:$0xff]
        %s253 = scalar_lea.vmem %s212, 8 [#allocation2]
        %v254 = vld [vmem:[%s253] sm:$0xff]
        %s255 = scalar_lea.vmem %s212, 16 [#allocation2]
        %v256 = vld [vmem:[%s255] sm:$0xff]
        %s257 = scalar_lea.vmem %s212, 24 [#allocation2]
        %v258 = vld [vmem:[%s257] sm:$0xff]
        %s259 = scalar_lea.vmem %s212, 32 [#allocation2]
        %v260 = vld [vmem:[%s259] sm:$0xff]
        %v261 = vmul.f32 %v252, %v254
        %v262 = vmul.f32 %v252, %v256
        %v263 = vmul.f32 %v252, %v258
        %v264 = vmul.f32 %v252, %v260
        %v265 = vmul.f32 %v254, %v256
        %v266 = vmul.f32 %v254, %v258
        %v267 = vmul.f32 %v254, %v260
        %v268 = vmul.f32 %v256, %v258
        %v269 = vmul.f32 %v256, %v260
        %v270 = vmul.f32 %v258, %v260
        %v272 = vlaneseq
        %v273 = vshrl.u32 %v272, 7
        %v274 = vsub.s32 0, %v273
        %v275 = vrot.slane %v246, %v274
        %vm277 = vcmask 261120
        %v279 = vsel %vm277, %v261, 0
        %v282 = vsel %vm277, %v262, 0
        %v285 = vsel %vm277, %v263, 0
        %v288 = vsel %vm277, %v264, 0
        %v291 = vsel %vm277, %v265, 0
        %v294 = vsel %vm277, %v266, 0
        %v297 = vsel %vm277, %v267, 0
        %v300 = vsel %vm277, %v268, 0
        %v303 = vsel %vm277, %v269, 0
        %v306 = vsel %vm277, %v270, 0
        %308 = vmatprep.subr.mxu0 0.0
        %309 = vmatpush1.msra.mxu0 %v242
        %310 = vmatprep.subr.mxu0 0.0
        %311 = vmatpush1.msra.mxu0 %v243
        %312 = vmatprep.subr.mxu0 0.0
        %313 = vmatpush1.msra.mxu0 %v244
        %314 = vmatprep.subr.mxu0 0.0
        %315 = vmatpush1.msra.mxu0 %v245
        %316 = vmatprep.subr.mxu0 0.0
        %317 = vmatpush1.msra.mxu0 0.0
        %318 = vmatprep.subr.mxu0 0.0
        %319 = vmatpush1.msra.mxu0 0.0
        %320 = vmatprep.subr.mxu0 0.0
        %321 = vmatpush1.msra.mxu0 0.0
        %322 = vmatprep.subr.mxu0 0.0
        %323 = vmatpush1.msra.mxu0 0.0
        %324 = vmatprep.subr.mxu0 0.0
        %325 = vmatpush1.msra.mxu0 0.0
        %326 = vmatprep.subr.mxu0 0.0
        %327 = vmatpush1.msra.mxu0 0.0
        %328 = vmatprep.subr.mxu0 0.0
        %329 = vmatpush1.msra.mxu0 0.0
        %330 = vmatprep.subr.mxu0 0.0
        %331 = vmatpush1.msra.mxu0 0.0
        %332 = vmatprep.subr.mxu0 0.0
        %333 = vmatpush1.msra.mxu0 0.0
        %334 = vmatprep.subr.mxu0 0.0
        %335 = vmatpush1.msra.mxu0 0.0
        %336 = vmatprep.subr.mxu0 0.0
        %337 = vmatpush1.msra.mxu0 0.0
        %338 = vmatprep.subr.mxu0 0.0
        %339 = vmatpush1.msra.mxu0 0.0
        %340 = vmatprep.subr.mxu0 0.0
        %341 = vmatpush1.msra.mxu0 0.0
        %342 = vmatprep.subr.mxu0 0.0
        %343 = vmatpush1.msra.mxu0 0.0
        %344 = vmatprep.subr.mxu0 0.0
        %345 = vmatpush1.msra.mxu0 0.0
        %346 = vmatprep.subr.mxu0 0.0
        %347 = vmatpush1.msra.mxu0 0.0
        %348 = vmatprep.subr.mxu0 0.0
        %349 = vmatpush1.msra.mxu0 0.0
        %350 = vmatprep.subr.mxu0 0.0
        %351 = vmatpush1.msra.mxu0 0.0
        %352 = vmatprep.subr.mxu0 0.0
        %353 = vmatpush1.msra.mxu0 0.0
        %354 = vmatprep.subr.mxu0 0.0
        %355 = vmatpush1.msra.mxu0 0.0
        %356 = vmatprep.subr.mxu0 0.0
        %357 = vmatpush1.msra.mxu0 0.0
        %358 = vmatprep.subr.mxu0 0.0
        %359 = vmatpush1.msra.mxu0 0.0
        %360 = vmatprep.subr.mxu0 0.0
        %361 = vmatpush1.msra.mxu0 0.0
        %362 = vmatprep.subr.mxu0 0.0
        %363 = vmatpush1.msra.mxu0 0.0
        %364 = vmatprep.subr.mxu0 0.0
        %365 = vmatpush1.msra.mxu0 0.0
        %366 = vmatprep.subr.mxu0 0.0
        %367 = vmatpush1.msra.mxu0 0.0
        %368 = vmatprep.subr.mxu0 0.0
        %369 = vmatpush1.msra.mxu0 0.0
        %370 = vmatprep.subr.mxu0 0.0
        %371 = vmatpush1.msra.mxu0 0.0
        %372 = vmatprep.mubr.f32.mxu0 0.0
        %373 = vmatmul.mubr.f32.gmra.mrb[0].mxu0 %v279
        %v374 = vpop.f32.mrb[0].mxu0
        %v375 = vadd.f32 %v275, %v374
        %v376 = vpop.f32.mrb[0].mxu0
        %377 = vmatprep.mubr.f32.mxu0 0.0
        %378 = vmatmul.mubr.f32.gmra.mrb[0].mxu0 %v282
        %v379 = vpop.f32.mrb[0].mxu0
        %v380 = vadd.f32 %v275, %v379
        %v381 = vpop.f32.mrb[0].mxu0
        %382 = vmatprep.mubr.f32.mxu0 0.0
        %383 = vmatmul.mubr.f32.gmra.mrb[0].mxu0 %v285
        %v384 = vpop.f32.mrb[0].mxu0
        %v385 = vadd.f32 %v275, %v384
        %v386 = vpop.f32.mrb[0].mxu0
        %387 = vmatprep.mubr.f32.mxu0 0.0
        %388 = vmatmul.mubr.f32.gmra.mrb[0].mxu0 %v288
        %v389 = vpop.f32.mrb[0].mxu0
        %v390 = vadd.f32 %v275, %v389
        %v391 = vpop.f32.mrb[0].mxu0
        %392 = vmatprep.mubr.f32.mxu0 0.0
        %393 = vmatmul.mubr.f32.gmra.mrb[0].mxu0 %v291
        %v394 = vpop.f32.mrb[0].mxu0
        %v395 = vadd.f32 %v275, %v394
        %v396 = vpop.f32.mrb[0].mxu0
        %397 = vmatprep.mubr.f32.mxu0 0.0
        %398 = vmatmul.mubr.f32.gmra.mrb[0].mxu0 %v294
        %v399 = vpop.f32.mrb[0].mxu0
        %v400 = vadd.f32 %v275, %v399
        %v401 = vpop.f32.mrb[0].mxu0
        %402 = vmatprep.mubr.f32.mxu0 0.0
        %403 = vmatmul.mubr.f32.gmra.mrb[0].mxu0 %v297
        %v404 = vpop.f32.mrb[0].mxu0
        %v405 = vadd.f32 %v275, %v404
        %v406 = vpop.f32.mrb[0].mxu0
        %407 = vmatprep.mubr.f32.mxu0 0.0
        %408 = vmatmul.mubr.f32.gmra.mrb[0].mxu0 %v300
        %v409 = vpop.f32.mrb[0].mxu0
        %v410 = vadd.f32 %v275, %v409
        %v411 = vpop.f32.mrb[0].mxu0
        %412 = vmatprep.mubr.f32.mxu0 0.0
        %413 = vmatmul.mubr.f32.gmra.mrb[0].mxu0 %v303
        %v414 = vpop.f32.mrb[0].mxu0
        %v415 = vadd.f32 %v275, %v414
        %v416 = vpop.f32.mrb[0].mxu0
        %417 = vmatprep.mubr.f32.mxu0 0.0
        %418 = vmatmul.mubr.f32.gmra.mrb[0].mxu0 %v306
        %v419 = vpop.f32.mrb[0].mxu0
        %v420 = vadd.f32 %v275, %v419
        %v421 = vpop.f32.mrb[0].mxu0
        %422 = vdwg.mxu0
        %v423 = vmax.f32 %v375, 0.0
        %v424 = vmax.f32 %v380, 0.0
        %v425 = vmax.f32 %v385, 0.0
        %v426 = vmax.f32 %v390, 0.0
        %v427 = vmax.f32 %v395, 0.0
        %v428 = vmax.f32 %v400, 0.0
        %v429 = vmax.f32 %v405, 0.0
        %v430 = vmax.f32 %v410, 0.0
        %v431 = vmax.f32 %v415, 0.0
        %v432 = vmax.f32 %v420, 0.0
        %vm433 = vcmask 31744
        %v435 = vsel %vm433, %v423, 0
        %v438 = vsel %vm433, %v424, 0
        %v441 = vsel %vm433, %v425, 0
        %v444 = vsel %vm433, %v426, 0
        %v447 = vsel %vm433, %v427, 0
        %v450 = vsel %vm433, %v428, 0
        %v453 = vsel %vm433, %v429, 0
        %v456 = vsel %vm433, %v430, 0
        %v459 = vsel %vm433, %v431, 0
        %v462 = vsel %vm433, %v432, 0
        %vm464 = vcmask 1043456
        %v466 = vsel %vm464, %v247, 0
        %468 = vmatprep.subr.mxu0 0.0
        %469 = vmatpush1.msra.mxu0 %v466
        %470 = vmatprep.subr.mxu0 0.0
        %471 = vmatpush1.msra.mxu0 0.0
        %472 = vmatprep.subr.mxu0 0.0
        %473 = vmatpush1.msra.mxu0 0.0
        %474 = vmatprep.subr.mxu0 0.0
        %475 = vmatpush1.msra.mxu0 0.0
        %476 = vmatprep.subr.mxu0 0.0
        %477 = vmatpush1.msra.mxu0 0.0
        %478 = vmatprep.subr.mxu0 0.0
        %479 = vmatpush1.msra.mxu0 0.0
        %480 = vmatprep.subr.mxu0 0.0
        %481 = vmatpush1.msra.mxu0 0.0
        %482 = vmatprep.subr.mxu0 0.0
        %483 = vmatpush1.msra.mxu0 0.0
        %484 = vmatprep.subr.mxu0 0.0
        %485 = vmatpush1.msra.mxu0 0.0
        %486 = vmatprep.subr.mxu0 0.0
        %487 = vmatpush1.msra.mxu0 0.0
        %488 = vmatprep.subr.mxu0 0.0
        %489 = vmatpush1.msra.mxu0 0.0
        %490 = vmatprep.subr.mxu0 0.0
        %491 = vmatpush1.msra.mxu0 0.0
        %492 = vmatprep.subr.mxu0 0.0
        %493 = vmatpush1.msra.mxu0 0.0
        %494 = vmatprep.subr.mxu0 0.0
        %495 = vmatpush1.msra.mxu0 0.0
        %496 = vmatprep.subr.mxu0 0.0
        %497 = vmatpush1.msra.mxu0 0.0
        %498 = vmatprep.subr.mxu0 0.0
        %499 = vmatpush1.msra.mxu0 0.0
        %500 = vmatprep.subr.mxu0 0.0
        %501 = vmatpush1.msra.mxu0 0.0
        %502 = vmatprep.subr.mxu0 0.0
        %503 = vmatpush1.msra.mxu0 0.0
        %504 = vmatprep.subr.mxu0 0.0
        %505 = vmatpush1.msra.mxu0 0.0
        %506 = vmatprep.subr.mxu0 0.0
        %507 = vmatpush1.msra.mxu0 0.0
        %508 = vmatprep.subr.mxu0 0.0
        %509 = vmatpush1.msra.mxu0 0.0
        %510 = vmatprep.subr.mxu0 0.0
        %511 = vmatpush1.msra.mxu0 0.0
        %512 = vmatprep.subr.mxu0 0.0
        %513 = vmatpush1.msra.mxu0 0.0
        %514 = vmatprep.subr.mxu0 0.0
        %515 = vmatpush1.msra.mxu0 0.0
        %516 = vmatprep.subr.mxu0 0.0
        %517 = vmatpush1.msra.mxu0 0.0
        %518 = vmatprep.subr.mxu0 0.0
        %519 = vmatpush1.msra.mxu0 0.0
        %520 = vmatprep.subr.mxu0 0.0
        %521 = vmatpush1.msra.mxu0 0.0
        %522 = vmatprep.subr.mxu0 0.0
        %523 = vmatpush1.msra.mxu0 0.0
        %524 = vmatprep.subr.mxu0 0.0
        %525 = vmatpush1.msra.mxu0 0.0
        %526 = vmatprep.subr.mxu0 0.0
        %527 = vmatpush1.msra.mxu0 0.0
        %528 = vmatprep.subr.mxu0 0.0
        %529 = vmatpush1.msra.mxu0 0.0
        %530 = vmatprep.subr.mxu0 0.0
        %531 = vmatpush1.msra.mxu0 0.0
        %532 = vmatprep.mubr.f32.mxu0 0.0
        %533 = vmatmul.mubr.f32.gmra.mrb[0].mxu0 %v435
        %v534 = vpop.f32.mrb[0].mxu0
        %v535 = vadd.f32 0.0, %v534
        %v536 = vpop.f32.mrb[0].mxu0
        %537 = vmatprep.mubr.f32.mxu0 0.0
        %538 = vmatmul.mubr.f32.gmra.mrb[0].mxu0 %v438
        %v539 = vpop.f32.mrb[0].mxu0
        %v540 = vadd.f32 0.0, %v539
        %v541 = vpop.f32.mrb[0].mxu0
        %542 = vmatprep.mubr.f32.mxu0 0.0
        %543 = vmatmul.mubr.f32.gmra.mrb[0].mxu0 %v441
        %v544 = vpop.f32.mrb[0].mxu0
        %v545 = vadd.f32 0.0, %v544
        %v546 = vpop.f32.mrb[0].mxu0
        %547 = vmatprep.mubr.f32.mxu0 0.0
        %548 = vmatmul.mubr.f32.gmra.mrb[0].mxu0 %v444
        %v549 = vpop.f32.mrb[0].mxu0
        %v550 = vadd.f32 0.0, %v549
        %v551 = vpop.f32.mrb[0].mxu0
        %552 = vmatprep.mubr.f32.mxu0 0.0
        %553 = vmatmul.mubr.f32.gmra.mrb[0].mxu0 %v447
        %v554 = vpop.f32.mrb[0].mxu0
        %v555 = vadd.f32 0.0, %v554
        %v556 = vpop.f32.mrb[0].mxu0
        %557 = vmatprep.mubr.f32.mxu0 0.0
        %558 = vmatmul.mubr.f32.gmra.mrb[0].mxu0 %v450
        %v559 = vpop.f32.mrb[0].mxu0
        %v560 = vadd.f32 0.0, %v559
        %v561 = vpop.f32.mrb[0].mxu0
        %562 = vmatprep.mubr.f32.mxu0 0.0
        %563 = vmatmul.mubr.f32.gmra.mrb[0].mxu0 %v453
        %v564 = vpop.f32.mrb[0].mxu0
        %v565 = vadd.f32 0.0, %v564
        %v566 = vpop.f32.mrb[0].mxu0
        %567 = vmatprep.mubr.f32.mxu0 0.0
        %568 = vmatmul.mubr.f32.gmra.mrb[0].mxu0 %v456
        %v569 = vpop.f32.mrb[0].mxu0
        %v570 = vadd.f32 0.0, %v569
        %v571 = vpop.f32.mrb[0].mxu0
        %572 = vmatprep.mubr.f32.mxu0 0.0
        %573 = vmatmul.mubr.f32.gmra.mrb[0].mxu0 %v459
        %v574 = vpop.f32.mrb[0].mxu0
        %v575 = vadd.f32 0.0, %v574
        %v576 = vpop.f32.mrb[0].mxu0
        %577 = vmatprep.mubr.f32.mxu0 0.0
        %578 = vmatmul.mubr.f32.gmra.mrb[0].mxu0 %v462
        %v579 = vpop.f32.mrb[0].mxu0
        %v580 = vadd.f32 0.0, %v579
        %v581 = vpop.f32.mrb[0].mxu0
        %582 = vdwg.mxu0
        %583 = vmatprep.subr.mxu0 0.0
        %584 = vmatpush1.msra.mxu0 %v248
        %585 = vmatprep.subr.mxu0 0.0
        %586 = vmatpush1.msra.mxu0 %v249
        %587 = vmatprep.subr.mxu0 0.0
        %588 = vmatpush1.msra.mxu0 %v250
        %589 = vmatprep.subr.mxu0 0.0
        %590 = vmatpush1.msra.mxu0 %v251
        %591 = vmatprep.subr.mxu0 0.0
        %592 = vmatpush1.msra.mxu0 0.0
        %593 = vmatprep.subr.mxu0 0.0
        %594 = vmatpush1.msra.mxu0 0.0
        %595 = vmatprep.subr.mxu0 0.0
        %596 = vmatpush1.msra.mxu0 0.0
        %597 = vmatprep.subr.mxu0 0.0
        %598 = vmatpush1.msra.mxu0 0.0
        %599 = vmatprep.subr.mxu0 0.0
        %600 = vmatpush1.msra.mxu0 0.0
        %601 = vmatprep.subr.mxu0 0.0
        %602 = vmatpush1.msra.mxu0 0.0
        %603 = vmatprep.subr.mxu0 0.0
        %604 = vmatpush1.msra.mxu0 0.0
        %605 = vmatprep.subr.mxu0 0.0
        %606 = vmatpush1.msra.mxu0 0.0
        %607 = vmatprep.subr.mxu0 0.0
        %608 = vmatpush1.msra.mxu0 0.0
        %609 = vmatprep.subr.mxu0 0.0
        %610 = vmatpush1.msra.mxu0 0.0
        %611 = vmatprep.subr.mxu0 0.0
        %612 = vmatpush1.msra.mxu0 0.0
        %613 = vmatprep.subr.mxu0 0.0
        %614 = vmatpush1.msra.mxu0 0.0
        %615 = vmatprep.subr.mxu0 0.0
        %616 = vmatpush1.msra.mxu0 0.0
        %617 = vmatprep.subr.mxu0 0.0
        %618 = vmatpush1.msra.mxu0 0.0
        %619 = vmatprep.subr.mxu0 0.0
        %620 = vmatpush1.msra.mxu0 0.0
        %621 = vmatprep.subr.mxu0 0.0
        %622 = vmatpush1.msra.mxu0 0.0
        %623 = vmatprep.subr.mxu0 0.0
        %624 = vmatpush1.msra.mxu0 0.0
        %625 = vmatprep.subr.mxu0 0.0
        %626 = vmatpush1.msra.mxu0 0.0
        %627 = vmatprep.subr.mxu0 0.0
        %628 = vmatpush1.msra.mxu0 0.0
        %629 = vmatprep.subr.mxu0 0.0
        %630 = vmatpush1.msra.mxu0 0.0
        %631 = vmatprep.subr.mxu0 0.0
        %632 = vmatpush1.msra.mxu0 0.0
        %633 = vmatprep.subr.mxu0 0.0
        %634 = vmatpush1.msra.mxu0 0.0
        %635 = vmatprep.subr.mxu0 0.0
        %636 = vmatpush1.msra.mxu0 0.0
        %637 = vmatprep.subr.mxu0 0.0
        %638 = vmatpush1.msra.mxu0 0.0
        %639 = vmatprep.subr.mxu0 0.0
        %640 = vmatpush1.msra.mxu0 0.0
        %641 = vmatprep.subr.mxu0 0.0
        %642 = vmatpush1.msra.mxu0 0.0
        %643 = vmatprep.subr.mxu0 0.0
        %644 = vmatpush1.msra.mxu0 0.0
        %645 = vmatprep.subr.mxu0 0.0
        %646 = vmatpush1.msra.mxu0 0.0
        %647 = vmatprep.mubr.f32.mxu0 0.0
        %648 = vmatmul.mubr.f32.gmra.mrb[0].mxu0 %v279
        %v649 = vpop.f32.mrb[0].mxu0
        %v650 = vadd.f32 0.0, %v649
        %v651 = vpop.f32.mrb[0].mxu0
        %652 = vmatprep.mubr.f32.mxu0 0.0
        %653 = vmatmul.mubr.f32.gmra.mrb[0].mxu0 %v282
        %v654 = vpop.f32.mrb[0].mxu0
        %v655 = vadd.f32 0.0, %v654
        %v656 = vpop.f32.mrb[0].mxu0
        %657 = vmatprep.mubr.f32.mxu0 0.0
        %658 = vmatmul.mubr.f32.gmra.mrb[0].mxu0 %v285
        %v659 = vpop.f32.mrb[0].mxu0
        %v660 = vadd.f32 0.0, %v659
        %v661 = vpop.f32.mrb[0].mxu0
        %662 = vmatprep.mubr.f32.mxu0 0.0
        %663 = vmatmul.mubr.f32.gmra.mrb[0].mxu0 %v288
        %v664 = vpop.f32.mrb[0].mxu0
        %v665 = vadd.f32 0.0, %v664
        %v666 = vpop.f32.mrb[0].mxu0
        %667 = vmatprep.mubr.f32.mxu0 0.0
        %668 = vmatmul.mubr.f32.gmra.mrb[0].mxu0 %v291
        %v669 = vpop.f32.mrb[0].mxu0
        %v670 = vadd.f32 0.0, %v669
        %v671 = vpop.f32.mrb[0].mxu0
        %672 = vmatprep.mubr.f32.mxu0 0.0
        %673 = vmatmul.mubr.f32.gmra.mrb[0].mxu0 %v294
        %v674 = vpop.f32.mrb[0].mxu0
        %v675 = vadd.f32 0.0, %v674
        %v676 = vpop.f32.mrb[0].mxu0
        %677 = vmatprep.mubr.f32.mxu0 0.0
        %678 = vmatmul.mubr.f32.gmra.mrb[0].mxu0 %v297
        %v679 = vpop.f32.mrb[0].mxu0
        %v680 = vadd.f32 0.0, %v679
        %v681 = vpop.f32.mrb[0].mxu0
        %682 = vmatprep.mubr.f32.mxu0 0.0
        %683 = vmatmul.mubr.f32.gmra.mrb[0].mxu0 %v300
        %v684 = vpop.f32.mrb[0].mxu0
        %v685 = vadd.f32 0.0, %v684
        %v686 = vpop.f32.mrb[0].mxu0
        %687 = vmatprep.mubr.f32.mxu0 0.0
        %688 = vmatmul.mubr.f32.gmra.mrb[0].mxu0 %v303
        %v689 = vpop.f32.mrb[0].mxu0
        %v690 = vadd.f32 0.0, %v689
        %v691 = vpop.f32.mrb[0].mxu0
        %692 = vmatprep.mubr.f32.mxu0 0.0
        %693 = vmatmul.mubr.f32.gmra.mrb[0].mxu0 %v306
        %v694 = vpop.f32.mrb[0].mxu0
        %v695 = vadd.f32 0.0, %v694
        %v696 = vpop.f32.mrb[0].mxu0
        %697 = vdwg.mxu0
        %vm698 = vcmask 7168
        %v699 = vsel %vm698, %v535, -inf
        %v700 = vsel %vm698, %v540, -inf
        %v701 = vsel %vm698, %v545, -inf
        %v702 = vsel %vm698, %v550, -inf
        %v703 = vsel %vm698, %v555, -inf
        %v704 = vmax.f32 %v699, %v703
        %v705 = vsel %vm698, %v560, -inf
        %v706 = vmax.f32 %v700, %v705
        %v707 = vsel %vm698, %v565, -inf
        %v708 = vmax.f32 %v701, %v707
        %v709 = vsel %vm698, %v570, -inf
        %v710 = vmax.f32 %v702, %v709
        %v711 = vsel %vm698, %v575, -inf
        %v712 = vmax.f32 %v704, %v711
        %v713 = vsel %vm698, %v580, -inf
        %v714 = vmax.f32 %v706, %v713
        %v715 = vmax.f32 %v712, %v714
        %v716 = vmax.f32 %v708, %v710
        %v717 = vmax.f32 %v715, %v716
        %v718 = vsub.f32 %v535, %v717
        %v719 = vsub.f32 %v540, %v717
        %v720 = vsub.f32 %v545, %v717
        %v721 = vsub.f32 %v550, %v717
        %v722 = vsub.f32 %v555, %v717
        %v723 = vsub.f32 %v560, %v717
        %v724 = vsub.f32 %v565, %v717
        %v725 = vsub.f32 %v570, %v717
        %v726 = vsub.f32 %v575, %v717
        %v727 = vsub.f32 %v580, %v717
        %v728 = vmul.f32 %v718, 1.442695
        %v729 = vpow.pop %v728
        %v730 = vmul.f32 %v719, 1.442695
        %v731 = vpow.pop %v730
        %v732 = vmul.f32 %v720, 1.442695
        %v733 = vpow.pop %v732
        %v734 = vmul.f32 %v721, 1.442695
        %v735 = vpow.pop %v734
        %v736 = vmul.f32 %v722, 1.442695
        %v737 = vpow.pop %v736
        %v738 = vmul.f32 %v723, 1.442695
        %v739 = vpow.pop %v738
        %v740 = vmul.f32 %v724, 1.442695
        %v741 = vpow.pop %v740
        %v742 = vmul.f32 %v725, 1.442695
        %v743 = vpow.pop %v742
        %v744 = vmul.f32 %v726, 1.442695
        %v745 = vpow.pop %v744
        %v746 = vmul.f32 %v727, 1.442695
        %v747 = vpow.pop %v746
        %v748 = vsel %vm698, %v729, 0.0
        %v749 = vsel %vm698, %v731, 0.0
        %v750 = vadd.f32 %v748, %v749
        %v751 = vsel %vm698, %v733, 0.0
        %v752 = vadd.f32 %v750, %v751
        %v753 = vsel %vm698, %v735, 0.0
        %v754 = vadd.f32 %v752, %v753
        %v755 = vsel %vm698, %v737, 0.0
        %v756 = vadd.f32 %v754, %v755
        %v757 = vsel %vm698, %v739, 0.0
        %v758 = vadd.f32 %v756, %v757
        %v759 = vsel %vm698, %v741, 0.0
        %v760 = vadd.f32 %v758, %v759
        %v761 = vsel %vm698, %v743, 0.0
        %v762 = vadd.f32 %v760, %v761
        %v763 = vsel %vm698, %v745, 0.0
        %v764 = vadd.f32 %v762, %v763
        %v765 = vsel %vm698, %v747, 0.0
        %v766 = vadd.f32 %v764, %v765
        %v767 = vrcp.pop %v766
        %v768 = vmul.f32 %v729, %v767
        %v769 = vmul.f32 %v731, %v767
        %v770 = vmul.f32 %v733, %v767
        %v771 = vmul.f32 %v735, %v767
        %v772 = vmul.f32 %v737, %v767
        %v773 = vmul.f32 %v739, %v767
        %v774 = vmul.f32 %v741, %v767
        %v775 = vmul.f32 %v743, %v767
        %v776 = vmul.f32 %v745, %v767
        %v777 = vmul.f32 %v747, %v767
        %v778 = vmul.f32 %v768, %v650
        %v779 = vmul.f32 %v769, %v655
        %v780 = vmul.f32 %v770, %v660
        %v781 = vmul.f32 %v771, %v665
        %v782 = vmul.f32 %v772, %v670
        %v783 = vmul.f32 %v773, %v675
        %v784 = vmul.f32 %v774, %v680
        %v785 = vmul.f32 %v775, %v685
        %v786 = vmul.f32 %v776, %v690
        %v787 = vmul.f32 %v777, %v695
        %v788 = vsel %vm698, %v778, 0.0
        %v789 = vsel %vm698, %v779, 0.0
        %v790 = vadd.f32 %v788, %v789
        %v791 = vsel %vm698, %v780, 0.0
        %v792 = vadd.f32 %v790, %v791
        %v793 = vsel %vm698, %v781, 0.0
        %v794 = vadd.f32 %v792, %v793
        %v795 = vsel %vm698, %v782, 0.0
        %v796 = vadd.f32 %v794, %v795
        %v797 = vsel %vm698, %v783, 0.0
        %v798 = vadd.f32 %v796, %v797
        %v799 = vsel %vm698, %v784, 0.0
        %v800 = vadd.f32 %v798, %v799
        %v801 = vsel %vm698, %v785, 0.0
        %v802 = vadd.f32 %v800, %v801
        %v803 = vsel %vm698, %v786, 0.0
        %v804 = vadd.f32 %v802, %v803
        %v805 = vsel %vm698, %v787, 0.0
        %v806 = vadd.f32 %v804, %v805
        %807 = vst.msk [vmem:[%s241] sm:$0xff] %vm698, %v806
        %p808 = scmp.lt.s32.totalorder %s19, 1
        %s809 = scalar_select %p808, %s19, 1
        %s810 = smul.addr %s809, 8
        %s811 = scalar_lea.vmem %s5, %s810
        // Predicated region
        $region45: #{tpu_custom_call.1} parent=39 // pred_check
          %p812 = pneg %p147
        $region46: #{tpu_custom_call.1} parent=39 // pred_check_branch
          %814 = sbr.rel (%p812) target = $region48
        $region47: #{tpu_custom_call.1} parent=39 // pred_region
          _
        $region48: #{tpu_custom_call.1} parent=39 // pred_fallthru
          _
      $region40: #{tpu_custom_call.1} parent=5 // pred_fallthru
        _
      %p815 = scmp.le.s32.totalorder 2, %s14
      // Predicated region
      $region49: #{tpu_custom_call.1} parent=5 // pred_check
        %p816 = pneg %p815
      $region50: #{tpu_custom_call.1} parent=5 // pred_check_branch
        %818 = sbr.rel (%p816) target = $region52
      $region51: #{tpu_custom_call.1} parent=5 // pred_region
        %s819 = ssub.s32 %s14, 2
        // Predicated region
        $region53: #{tpu_custom_call.1} parent=51 // pred_check
          %p820 = pneg %p153
        $region54: #{tpu_custom_call.1} parent=51 // pred_check_branch
          %822 = sbr.rel (%p820) target = $region56
        $region55: #{tpu_custom_call.1} parent=51 // pred_region
          %p823 = scmp.lt.s32.totalorder %s20, 1
          %s824 = scalar_select %p823, %s20, 1
          %s825 = smul.addr %s824, 8
          %s826 = scalar_lea.vmem %s5, %s825
        $region56: #{tpu_custom_call.1} parent=51 // pred_fallthru
          _
      $region52: #{tpu_custom_call.1} parent=5 // pred_fallthru
        _
    $region6: #{tpu_custom_call.1} parent=1 // loop_footer
      %s18 = sadd.s32 1, %s14
    $region7: #{tpu_custom_call.1} parent=1 // loop_footer_branch
      %13 = sbr.rel target = $region3
    $region8: #{tpu_custom_call.1} parent=1 // loop_exit
      _
    %827 = vsyncpa [#allocation3], 1
    %s828 = scalar_lea.sflag [#allocation3], 1
    %829 = vsyncpa %s828, 1

</llo_original>
